<compile_context>
chip_gen: v7x
topology: tpu7x:2x2x1
jax: 0.10.0
libtpu: 0.0.40
codegen_flags: <defaults>
</compile_context>

<pallas_src>
import functools

import jax
import jax.numpy as jnp
from jax.experimental import pallas as pl
from jax.experimental.pallas import tpu as pltpu


def _round_up(x, m):
    return (x + m - 1) // m * m


def _sublane(dtype):
    # Minimum second-to-last-dim alignment for a given element size.
    return {4: 8, 2: 16, 1: 32}.get(jnp.dtype(dtype).itemsize, 8)


def residual_mlp_kernel(x_ref, w1_ref, b1_ref, w2_ref, b2_ref, o_ref):
    """o = x + relu(x @ w1 + b1) @ w2 + b2, fused for one row tile."""
    x = x_ref[...]
    x_f32 = x.astype(jnp.float32)                       # residual path stays f32
    h = jnp.dot(x.astype(jnp.bfloat16), w1_ref[...],
                preferred_element_type=jnp.float32)     # MXU, f32 accumulate
    h = jnp.maximum(h + b1_ref[...], 0.0)               # bias + ReLU (VPU, f32)
    y = jnp.dot(h.astype(jnp.bfloat16), w2_ref[...],
                preferred_element_type=jnp.float32)
    y = y + b2_ref[...]
    o_ref[...] = (x_f32 + y).astype(o_ref.dtype)        # residual add in f32


def prepare_residual_mlp_params(w1, b1, w2, b2):
    """One-time prep: bf16 weights, hidden dim padded to a lane-dense 128 multiple.

    Zero padding is exact: padded w1 columns give h columns equal to the zero
    padded bias, relu(0) = 0, and the matching padded w2 rows are zero, so the
    padded hidden channels contribute nothing to the output.
    """
    D, H = w1.shape
    Hp = _round_up(H, 128)
    w1p = jnp.zeros((D, Hp), jnp.bfloat16).at[:, :H].set(w1.astype(jnp.bfloat16))
    w2p = jnp.zeros((Hp, D), jnp.bfloat16).at[:H, :].set(w2.astype(jnp.bfloat16))
    b1p = jnp.zeros((1, Hp), jnp.float32).at[0, :H].set(b1.astype(jnp.float32))
    b2p = b2.astype(jnp.float32).reshape(1, D)
    return w1p, b1p, w2p, b2p


@functools.partial(jax.jit, static_argnames=("tm",))
def residual_mlp(x, w1p, b1p, w2p, b2p, *, tm=None):
    """x: (B, N, D) -> (B, N, D), computes x + MLP(x) in one Pallas kernel."""
    B, N, D = x.shape
    Hp = w1p.shape[1]
    M = B * N
    sub = _sublane(x.dtype)

    # Row tile: big enough to approach the HBM roofline (>= 512 KiB per DMA),
    # clamped to the (aligned) row count for tiny inputs, and split so a v7x
    # chip's two TensorCores both get work when M is large.
    if tm is None:
        tm = 2048 if D <= 256 else 1024
    tm_eff = min(tm, _round_up(M, sub))
    if M >= 512 and pl.cdiv(M, tm_eff) < 2:
        tm_eff = _round_up(pl.cdiv(M, 2), sub)
    grid = (pl.cdiv(M, tm_eff),)  # partial last block: OOB rows are never written

    x2 = x.reshape(M, D)          # contiguous collapse: no pad, no extra HBM pass

    def weight_spec(shape):
        # Grid-invariant blocks: single-buffered, resident in VMEM.
        return pl.BlockSpec(shape, lambda i: (0, 0), pipeline_mode=pl.Buffered(1))

    in_itemsize = jnp.dtype(x.dtype).itemsize
    # Explicit VMEM budget: double-buffered x/out tiles + resident weights + slack.
    vmem_needed = (
        2 * tm_eff * D * in_itemsize      # x row tile, double buffered
        + 2 * tm_eff * D * in_itemsize    # out row tile, double buffered
        + 2 * D * Hp * 2                  # bf16 w1 + w2, resident
        + (Hp + D) * 4                    # f32 biases
        + 2 * tm_eff * Hp * 4             # f32 intermediates / compiler scratch
    )
    vmem_limit = int(min(48 * 1024 * 1024, max(2 * vmem_needed, 16 * 1024 * 1024)))

    cost = pl.CostEstimate(
        flops=4 * M * D * Hp + 4 * M * D + M * Hp,
        transcendentals=0,
        bytes_accessed=(2 * M * D * in_itemsize      # x in + out
                        + 2 * D * Hp * 2             # bf16 weights
                        + (Hp + D) * 4),             # f32 biases
    )

    out = pl.pallas_call(
        residual_mlp_kernel,
        out_shape=jax.ShapeDtypeStruct((M, D), x.dtype),
        grid_spec=pltpu.PrefetchScalarGridSpec(
            num_scalar_prefetch=0,
            grid=grid,
            in_specs=[
                pl.BlockSpec((tm_eff, D), lambda i: (i, 0)),  # x row tile
                weight_spec(w1p.shape),                       # w1 (resident)
                weight_spec(b1p.shape),                       # b1
                weight_spec(w2p.shape),                       # w2 (resident)
                weight_spec(b2p.shape),                       # b2
            ],
            out_specs=pl.BlockSpec((tm_eff, D), lambda i: (i, 0)),
        ),
        compiler_params=pltpu.CompilerParams(
            dimension_semantics=("parallel",),
            vmem_limit_bytes=vmem_limit,
        ),
        cost_estimate=cost,
    )(x2, w1p, b1p, w2p, b2p)

    return out.reshape(B, N, D)


if __name__ == "__main__":
    # Small shapes: batch=2, seq=8, feature D=32, MLP hidden H=64.
    B, N, D, H = 2, 8, 32, 64
    key = jax.random.PRNGKey(0)
    kx, kw1, kb1, kw2, kb2 = jax.random.split(key, 5)

    x = jax.random.normal(kx, (B, N, D), dtype=jnp.float32)
    # Deterministic synthetic params (nn.Linear shapes, stored pre-transposed (in, out)).
    w1 = jax.random.normal(kw1, (D, H), dtype=jnp.float32) * 0.05
    b1 = jax.random.normal(kb1, (H,), dtype=jnp.float32) * 0.01
    w2 = jax.random.normal(kw2, (H, D), dtype=jnp.float32) * 0.05
    b2 = jax.random.normal(kb2, (D,), dtype=jnp.float32) * 0.01

    # One-time weight prep (bf16 cast + hidden-dim pad), hoisted out of the call.
    params = prepare_residual_mlp_params(w1, b1, w2, b2)

    out = residual_mlp(x, *params)
    jax.block_until_ready(out)

    # Pure-JAX f32 reference for the same Residual(MLP) forward.
    ref = x + (jnp.maximum(x.reshape(-1, D) @ w1 + b1, 0.0) @ w2 + b2).reshape(B, N, D)
    max_err = float(jnp.max(jnp.abs(out - ref)))
    # Tolerance loosened vs an f32-only path because MXU operands are bf16.
    assert jnp.allclose(out, ref, atol=2e-2, rtol=2e-2), f"mismatch vs reference (max err {max_err})"

    print("KERNEL_OK")
</pallas_src>

<mosaic_0001>
module attributes {stable_mosaic.version = 11 : i64} {
  func.func @residual_mlp_kernel(%arg0: i32, %arg1: memref<16x32xf32, #tpu.memory_space<vmem>>, %arg2: memref<32x128xbf16, #tpu.memory_space<vmem>>, %arg3: memref<1x128xf32, #tpu.memory_space<vmem>>, %arg4: memref<128x32xbf16, #tpu.memory_space<vmem>>, %arg5: memref<1x32xf32, #tpu.memory_space<vmem>>, %arg6: memref<16x32xf32, #tpu.memory_space<vmem>>) attributes {dimension_semantics = [#tpu.dimension_semantics<parallel>], iteration_bounds = array<i64: 1>, scalar_prefetch = 0 : i64, scratch_operands = 0 : i64, tpu.core_type = #tpu.core_type<tc>, window_params = [{transform_indices = @transform_0, window_bounds = array<i64: 16, 32>}, {pipeline_mode = #tpu.pipeline_mode<synchronous>, transform_indices = @transform_1, window_bounds = array<i64: 32, 128>}, {pipeline_mode = #tpu.pipeline_mode<synchronous>, transform_indices = @transform_2, window_bounds = array<i64: 1, 128>}, {pipeline_mode = #tpu.pipeline_mode<synchronous>, transform_indices = @transform_3, window_bounds = array<i64: 128, 32>}, {pipeline_mode = #tpu.pipeline_mode<synchronous>, transform_indices = @transform_4, window_bounds = array<i64: 1, 32>}, {transform_indices = @transform_5, window_bounds = array<i64: 16, 32>}]} {
    %c0 = arith.constant 0 : index
    %c0_0 = arith.constant 0 : index
    %0 = vector.load %arg1[%c0, %c0_0] : memref<16x32xf32, #tpu.memory_space<vmem>>, vector<16x32xf32>
    %1 = arith.truncf %0 : vector<16x32xf32> to vector<16x32xbf16>
    %c0_1 = arith.constant 0 : index
    %c0_2 = arith.constant 0 : index
    %2 = vector.load %arg2[%c0_1, %c0_2] : memref<32x128xbf16, #tpu.memory_space<vmem>>, vector<32x128xbf16>
    %cst = arith.constant dense<0.000000e+00> : vector<16x128xf32>
    %3 = tpu.matmul %1, %2, %cst {dimension_numbers = #tpu.dot_dimension_numbers<[1], [0], [0], [1], [0, 0, 1, 1], [], []>} : vector<16x32xbf16>, vector<32x128xbf16>, vector<16x128xf32> -> vector<16x128xf32>
    %c0_3 = arith.constant 0 : index
    %c0_4 = arith.constant 0 : index
    %4 = vector.load %arg3[%c0_3, %c0_4] : memref<1x128xf32, #tpu.memory_space<vmem>>, vector<1x128xf32>
    %5 = vector.broadcast %4 : vector<1x128xf32> to vector<16x128xf32>
    %6 = arith.addf %3, %5 : vector<16x128xf32>
    %cst_5 = arith.constant 0.000000e+00 : f32
    %7 = vector.broadcast %cst_5 : f32 to vector<16x128xf32>
    %8 = arith.maximumf %6, %7 : vector<16x128xf32>
    %9 = arith.truncf %8 : vector<16x128xf32> to vector<16x128xbf16>
    %c0_6 = arith.constant 0 : index
    %c0_7 = arith.constant 0 : index
    %10 = vector.load %arg4[%c0_6, %c0_7] : memref<128x32xbf16, #tpu.memory_space<vmem>>, vector<128x32xbf16>
    %cst_8 = arith.constant dense<0.000000e+00> : vector<16x32xf32>
    %11 = tpu.matmul %9, %10, %cst_8 {dimension_numbers = #tpu.dot_dimension_numbers<[1], [0], [0], [1], [0, 0, 1, 1], [], []>} : vector<16x128xbf16>, vector<128x32xbf16>, vector<16x32xf32> -> vector<16x32xf32>
    %c0_9 = arith.constant 0 : index
    %c0_10 = arith.constant 0 : index
    %12 = vector.load %arg5[%c0_9, %c0_10] : memref<1x32xf32, #tpu.memory_space<vmem>>, vector<1x32xf32>
    %13 = vector.broadcast %12 : vector<1x32xf32> to vector<16x32xf32>
    %14 = arith.addf %11, %13 : vector<16x32xf32>
    %15 = arith.addf %0, %14 : vector<16x32xf32>
    %c0_11 = arith.constant 0 : index
    %c0_12 = arith.constant 0 : index
    %16 = vector.load %arg6[%c0_11, %c0_12] : memref<16x32xf32, #tpu.memory_space<vmem>>, vector<16x32xf32>
    tpu.vector_store %arg6[%c0_11, %c0_12], %15 {strides = array<i32>} : memref<16x32xf32, #tpu.memory_space<vmem>>, vector<16x32xf32>,
    return
  }
  func.func @transform_0(%arg0: i32) -> (i32, i32) {
    %c0_i32 = arith.constant 0 : i32
    %c0_i32_0 = arith.constant 0 : i32
    return %arg0, %c0_i32 : i32, i32
  }
  func.func @transform_1(%arg0: i32) -> (i32, i32) {
    %c0_i32 = arith.constant 0 : i32
    %c0_i32_0 = arith.constant 0 : i32
    %c0_i32_1 = arith.constant 0 : i32
    return %c0_i32, %c0_i32_0 : i32, i32
  }
  func.func @transform_2(%arg0: i32) -> (i32, i32) {
    %c0_i32 = arith.constant 0 : i32
    %c0_i32_0 = arith.constant 0 : i32
    %c0_i32_1 = arith.constant 0 : i32
    return %c0_i32, %c0_i32_0 : i32, i32
  }
  func.func @transform_3(%arg0: i32) -> (i32, i32) {
    %c0_i32 = arith.constant 0 : i32
    %c0_i32_0 = arith.constant 0 : i32
    %c0_i32_1 = arith.constant 0 : i32
    return %c0_i32, %c0_i32_0 : i32, i32
  }
  func.func @transform_4(%arg0: i32) -> (i32, i32) {
    %c0_i32 = arith.constant 0 : i32
    %c0_i32_0 = arith.constant 0 : i32
    %c0_i32_1 = arith.constant 0 : i32
    return %c0_i32, %c0_i32_0 : i32, i32
  }
  func.func @transform_5(%arg0: i32) -> (i32, i32) {
    %c0_i32 = arith.constant 0 : i32
    %c0_i32_0 = arith.constant 0 : i32
    return %arg0, %c0_i32 : i32, i32
  }
}

</mosaic_0001>

<llo_original>
// kernel: residual_mlp.1
$region0: #{residual_mlp.1}
  #allocation0 [shape = 'u32[]', space=smem, size = 0x4, offset = 0x4, fixed_abs, tag = 'smem constant byte address 0x4 - core index']
  #allocation1 [shape = 'u32[144,128]{1,0:T(1,128)}', space=vmem, size = 0x12000, scoped, tag = 'internal scratch']
  %s0 = inlined_call_operand.vmem [shape: f32[16,32], index: 0, kind: input, shape index: {}]
  %s1 = inlined_call_operand.vmem [shape: bf16[32,128], index: 1, kind: input, shape index: {}]
  %s2 = inlined_call_operand.vmem [shape: f32[1,128], index: 2, kind: input, shape index: {}]
  %s3 = inlined_call_operand.vmem [shape: bf16[128,32], index: 3, kind: input, shape index: {}]
  %s4 = inlined_call_operand.vmem [shape: f32[1,32], index: 4, kind: input, shape index: {}]
  %s5 = inlined_call_operand.hbm [shape: f32[16,32], index: 5, kind: output, shape index: {}]
  %s6 = sld [smem:[#allocation0]]
  $region30: #{residual_mlp.1} parent=0
    _
  %s8 = ssub.s32 1, %s6
  %s9 = scalar_select 0, %s8, %s6
  $region1: #{residual_mlp.1} parent=0
    #allocation2 [shape = 'u8[8192]{0}', space=vmem, size = 0x2000, scoped, tag = 'output window, operand 0, single buffered']
    #allocation3 [shape = 's32[1]{0}', space=sflag, size = 0x4, scoped, tag = 'scoped memory for residual_mlp.1']
    %10 = vsyncpa [#allocation3], 0
    // Predicated region
    $region2: #{residual_mlp.1} parent=1 // pred_check
      _
    $region3: #{residual_mlp.1} parent=1 // pred_check_branch
      %12 = sbr.rel (0) target = $region5
    $region4: #{residual_mlp.1} parent=1 // pred_region
      _
    $region5: #{residual_mlp.1} parent=1 // pred_fallthru
      _
    // Predicated region
    $region6: #{residual_mlp.1} parent=1 // pred_check
      _
    $region7: #{residual_mlp.1} parent=1 // pred_check_branch
      %14 = sbr.rel (0) target = $region9
    $region8: #{residual_mlp.1} parent=1 // pred_region
      _
    $region9: #{residual_mlp.1} parent=1 // pred_fallthru
      _
    // Predicated region
    $region10: #{residual_mlp.1} parent=1 // pred_check
      _
    $region11: #{residual_mlp.1} parent=1 // pred_check_branch
      %16 = sbr.rel (0) target = $region13
    $region12: #{residual_mlp.1} parent=1 // pred_region
      _
    $region13: #{residual_mlp.1} parent=1 // pred_fallthru
      _
    // Predicated region
    $region14: #{residual_mlp.1} parent=1 // pred_check
      _
    $region15: #{residual_mlp.1} parent=1 // pred_check_branch
      %18 = sbr.rel (0) target = $region17
    $region16: #{residual_mlp.1} parent=1 // pred_region
      _
    $region17: #{residual_mlp.1} parent=1 // pred_fallthru
      _
    // Predicated region
    $region18: #{residual_mlp.1} parent=1 // pred_check
      _
    $region19: #{residual_mlp.1} parent=1 // pred_check_branch
      %20 = sbr.rel (0) target = $region21
    $region20: #{residual_mlp.1} parent=1 // pred_region
      _
    $region21: #{residual_mlp.1} parent=1 // pred_fallthru
      _
    %v22 = vld [vmem:[%s0] sm:$0xff]
    %v23 = vld [vmem:[%s0 + $0x8] sm:$0xff]
    %v24 = vpack.c.bf16 %v23, %v22
    %v25 = vld [vmem:[%s1] sm:$0xf]
    %v26 = vld [vmem:[%s1 + $0x4] sm:$0xf]
    %v27 = vld [vmem:[%s1 + $0x8] sm:$0xf]
    %v28 = vld [vmem:[%s1 + $0xc] sm:$0xf]
    %v29 = vld [vmem:[%s2] sm:$0x1]
    %v31 = vlaneseq
    %v32 = vshrl.u32 %v31, 7
    %v33 = vsub.s32 0, %v32
    %v34 = vrot.slane %v29, %v33
    %v40 = vunpack.c.l.b16 %v25
    %v41 = vunpack.c.l.b16 %v26
    %v42 = vunpack.c.l.b16 %v27
    %v43 = vunpack.c.l.b16 %v28
    %v44 = vpack.c.b16 %v41, %v40
    %v45 = vpack.c.b16 %v43, %v42
    %vm48 = vcmask 261120
    %v50 = vsel %vm48, %v24, 0
    %52 = vmatprep.subr.bf16.mxu0 0
    %53 = vmatpush1.bf16.msra.mxu0 %v44
    %54 = vmatprep.subr.bf16.mxu0 0
    %55 = vmatpush1.bf16.msra.mxu0 %v45
    %56 = vmatprep.subr.bf16.mxu0 0
    %57 = vmatpush1.bf16.msra.mxu0 0
    %58 = vmatprep.subr.bf16.mxu0 0
    %59 = vmatpush1.bf16.msra.mxu0 0
    %60 = vmatprep.subr.bf16.mxu0 0
    %61 = vmatpush1.bf16.msra.mxu0 0
    %62 = vmatprep.subr.bf16.mxu0 0
    %63 = vmatpush1.bf16.msra.mxu0 0
    %64 = vmatprep.subr.bf16.mxu0 0
    %65 = vmatpush1.bf16.msra.mxu0 0
    %66 = vmatprep.subr.bf16.mxu0 0
    %67 = vmatpush1.bf16.msra.mxu0 0
    %68 = vmatprep.subr.bf16.mxu0 0
    %69 = vmatpush1.bf16.msra.mxu0 0
    %70 = vmatprep.subr.bf16.mxu0 0
    %71 = vmatpush1.bf16.msra.mxu0 0
    %72 = vmatprep.subr.bf16.mxu0 0
    %73 = vmatpush1.bf16.msra.mxu0 0
    %74 = vmatprep.subr.bf16.mxu0 0
    %75 = vmatpush1.bf16.msra.mxu0 0
    %76 = vmatprep.subr.bf16.mxu0 0
    %77 = vmatpush1.bf16.msra.mxu0 0
    %78 = vmatprep.subr.bf16.mxu0 0
    %79 = vmatpush1.bf16.msra.mxu0 0
    %80 = vmatprep.subr.bf16.mxu0 0
    %81 = vmatpush1.bf16.msra.mxu0 0
    %82 = vmatprep.subr.bf16.mxu0 0
    %83 = vmatpush1.bf16.msra.mxu0 0
    %84 = vmatprep.mubr.bf16.mxu0 0
    %85 = vmatmul.mubr.bf16.gmra.mrb[0].mxu0 %v50
    %v86 = vpop.f32.mrb[0].mxu0
    %v87 = vadd.f32 %v34, %v86
    %v88 = vpop.f32.mrb[0].mxu0
    %v89 = vpop.f32.mrb[0].mxu0
    %v90 = vadd.f32 %v34, %v89
    %v91 = vpop.f32.mrb[0].mxu0
    %92 = vdwg.mxu0
    %v93 = vmax.f32 %v87, 0.0
    %v94 = vmax.f32 %v90, 0.0
    %v95 = vpack.c.bf16 %v94, %v93
    %v96 = vld [vmem:[%s3] sm:$0xf]
    %v97 = vld [vmem:[%s3 + $0x4] sm:$0xf]
    %v98 = vld [vmem:[%s3 + $0x8] sm:$0xf]
    %v99 = vld [vmem:[%s3 + $0xc] sm:$0xf]
    %v100 = vld [vmem:[%s3 + $0x10] sm:$0xf]
    %v101 = vld [vmem:[%s3 + $0x14] sm:$0xf]
    %v102 = vld [vmem:[%s3 + $0x18] sm:$0xf]
    %v103 = vld [vmem:[%s3 + $0x1c] sm:$0xf]
    %v104 = vld [vmem:[%s3 + $0x20] sm:$0xf]
    %v105 = vld [vmem:[%s3 + $0x24] sm:$0xf]
    %v106 = vld [vmem:[%s3 + $0x28] sm:$0xf]
    %v107 = vld [vmem:[%s3 + $0x2c] sm:$0xf]
    %v108 = vld [vmem:[%s3 + $0x30] sm:$0xf]
    %v109 = vld [vmem:[%s3 + $0x34] sm:$0xf]
    %v110 = vld [vmem:[%s3 + $0x38] sm:$0xf]
    %v111 = vld [vmem:[%s3 + $0x3c] sm:$0xf]
    %v112 = vld [vmem:[%s4] sm:$0x1]
    %v114 = vlaneseq
    %v115 = vshrl.u32 %v114, 7
    %v116 = vsub.s32 0, %v115
    %v117 = vrot.slane %v112, %v116
    %v135 = vunpack.c.l.b16 %v96
    %v136 = vunpack.c.l.b16 %v97
    %v137 = vunpack.c.l.b16 %v98
    %v138 = vunpack.c.l.b16 %v99
    %v139 = vunpack.c.l.b16 %v100
    %v140 = vunpack.c.l.b16 %v101
    %v141 = vunpack.c.l.b16 %v102
    %v142 = vunpack.c.l.b16 %v103
    %v143 = vunpack.c.l.b16 %v104
    %v144 = vunpack.c.l.b16 %v105
    %v145 = vunpack.c.l.b16 %v106
    %v146 = vunpack.c.l.b16 %v107
    %v147 = vunpack.c.l.b16 %v108
    %v148 = vunpack.c.l.b16 %v109
    %v149 = vunpack.c.l.b16 %v110
    %v150 = vunpack.c.l.b16 %v111
    %v151 = vpack.c.b16 %v136, %v135
    %v152 = vpack.c.b16 %v138, %v137
    %v153 = vpack.c.b16 %v140, %v139
    %v154 = vpack.c.b16 %v142, %v141
    %v155 = vpack.c.b16 %v144, %v143
    %v156 = vpack.c.b16 %v146, %v145
    %v157 = vpack.c.b16 %v148, %v147
    %v158 = vpack.c.b16 %v150, %v149
    %167 = vmatprep.subr.bf16.mxu0 0
    %168 = vmatpush1.bf16.msra.mxu0 %v151
    %169 = vmatprep.subr.bf16.mxu0 0
    %170 = vmatpush1.bf16.msra.mxu0 %v152
    %171 = vmatprep.subr.bf16.mxu0 0
    %172 = vmatpush1.bf16.msra.mxu0 %v153
    %173 = vmatprep.subr.bf16.mxu0 0
    %174 = vmatpush1.bf16.msra.mxu0 %v154
    %175 = vmatprep.subr.bf16.mxu0 0
    %176 = vmatpush1.bf16.msra.mxu0 %v155
    %177 = vmatprep.subr.bf16.mxu0 0
    %178 = vmatpush1.bf16.msra.mxu0 %v156
    %179 = vmatprep.subr.bf16.mxu0 0
    %180 = vmatpush1.bf16.msra.mxu0 %v157
    %181 = vmatprep.subr.bf16.mxu0 0
    %182 = vmatpush1.bf16.msra.mxu0 %v158
    %183 = vmatprep.subr.bf16.mxu0 0
    %184 = vmatpush1.bf16.msra.mxu0 0
    %185 = vmatprep.subr.bf16.mxu0 0
    %186 = vmatpush1.bf16.msra.mxu0 0
    %187 = vmatprep.subr.bf16.mxu0 0
    %188 = vmatpush1.bf16.msra.mxu0 0
    %189 = vmatprep.subr.bf16.mxu0 0
    %190 = vmatpush1.bf16.msra.mxu0 0
    %191 = vmatprep.subr.bf16.mxu0 0
    %192 = vmatpush1.bf16.msra.mxu0 0
    %193 = vmatprep.subr.bf16.mxu0 0
    %194 = vmatpush1.bf16.msra.mxu0 0
    %195 = vmatprep.subr.bf16.mxu0 0
    %196 = vmatpush1.bf16.msra.mxu0 0
    %197 = vmatprep.subr.bf16.mxu0 0
    %198 = vmatpush1.bf16.msra.mxu0 0
    %199 = vmatprep.mubr.bf16.mxu0 0
    %200 = vmatmul.mubr.bf16.gmra.mrb[0].mxu0 %v95
    %v201 = vpop.f32.mrb[0].mxu0
    %v202 = vadd.f32 %v117, %v201
    %v203 = vpop.f32.mrb[0].mxu0
    %v204 = vpop.f32.mrb[0].mxu0
    %v205 = vadd.f32 %v117, %v204
    %v206 = vpop.f32.mrb[0].mxu0
    %207 = vdwg.mxu0
    %v208 = vadd.f32 %v22, %v202
    %v209 = vadd.f32 %v23, %v205
    %210 = vst.msk [vmem:[#allocation2] sm:$0xff] %vm48, %v208
    %211 = vst.msk [vmem:[#allocation2 + $0x8] sm:$0xff] %vm48, %v209
    // Predicated region
    $region22: #{residual_mlp.1} parent=1 // pred_check
      _
    $region23: #{residual_mlp.1} parent=1 // pred_check_branch
      %213 = sbr.rel (0) target = $region25
    $region24: #{residual_mlp.1} parent=1 // pred_region
      %s215 = ssub.s32 256, 256
      %216 = vsyncadd [#allocation3], %s215
      %s217 = sshll.u32 [#allocation2], 4
      %s218 = int_to_ptr.vmem [resolvable:$true] %s217
      %223 = dma.vmem_to_hbm [thread:$0]  %s218, 256, %s5, [#allocation3], 128, 128, 8
    $region25: #{residual_mlp.1} parent=1 // pred_fallthru
      _
    // Predicated region
    $region26: #{residual_mlp.1} parent=1 // pred_check
      _
    $region27: #{residual_mlp.1} parent=1 // pred_check_branch
      %225 = sbr.rel (0) target = $region29
    $region28: #{residual_mlp.1} parent=1 // pred_region
      %226 = dma.done [#allocation3], 256
    $region29: #{residual_mlp.1} parent=1 // pred_fallthru
      _
    %227 = vsyncpa [#allocation3], 1

</llo_original>
